<compile_context>
chip_gen: v7x
topology: tpu7x:2x2x1
jax: 0.10.0
libtpu: 0.0.40
codegen_flags: <defaults>
</compile_context>

<pallas_src>
import jax
import jax.numpy as jnp
from jax.experimental import pallas as pl
from jax.experimental.pallas import tpu as pltpu


def self_attention_single_kernel(x_ref, w_all_ref, b_all_ref, o_ref):
    D = o_ref.shape[-1]

    x_row = x_ref[...]                                                 # [1, D] f32

    # Fused Q/K/V projection on the MXU. dot_general contracts the shared input
    # dim of the (out, in)-layout weights directly — no wrapper-side or
    # in-kernel weight transpose — and the bias add stays lane-dense.
    qkv = jax.lax.dot_general(
        x_row, w_all_ref[...],
        dimension_numbers=(((1,), (1,)), ((), ())),
        preferred_element_type=jnp.float32) + b_all_ref[...]           # [1, 3D]

    q_row = qkv[:, 0:D]                                                # [1, D]
    k_row = qkv[:, D:2 * D]                                            # [1, D]
    v_row = qkv[:, 2 * D:3 * D]                                        # [1, D]

    # The only relayout in the kernel: K as a column so the rank-1 scores stay
    # transposed (s_t[j, i] = K[j] * Q[i]) and everything else is a row.
    k_col = jnp.transpose(k_row)                                       # [D, 1]

    # Rank-1 softmax max:  max_j Q[i]*K[j] = Q[i]*max(K) if Q[i] >= 0 else
    # Q[i]*min(K).  Two tiny row reductions instead of a [D, D] max pass.
    k_max = jnp.max(k_row, axis=1, keepdims=True)                      # [1, 1]
    k_min = jnp.min(k_row, axis=1, keepdims=True)                      # [1, 1]
    m = jnp.where(q_row >= 0.0, q_row * k_max, q_row * k_min)          # [1, D]

    s_t = k_col * q_row                                                # [D, D] VPU outer product
    e = jnp.exp(s_t - m)                                               # [D, D] EUP

    denom = jnp.sum(e, axis=0, keepdims=True)                          # [1, D] XLU sublane reduce
    # Weighted sum on the otherwise-idle MXU: out[i] = sum_j V[j] * e[j, i].
    weighted = jnp.dot(v_row, e, preferred_element_type=jnp.float32)   # [1, D]

    # Exact reciprocal: a single [1, D] op, approx=True buys nothing here.
    o_ref[...] = (weighted * pl.reciprocal(denom, approx=False)).astype(o_ref.dtype)


def prepare_params(wq, bq, wk, bk, wv, bv):
    """One-time parameter fusion (do this OUTSIDE the per-call hot path)."""
    w_all = jnp.concatenate([wq, wk, wv], axis=0).astype(jnp.float32)          # [3D, D]
    b_all = jnp.concatenate([bq, bk, bv], axis=0).astype(jnp.float32)[None, :]  # [1, 3D]
    return w_all, b_all


def self_attention_single(x, w_all, b_all):
    """x: [D] (or [1, D]); w_all: [3D, D] fused (out, in) weights; b_all: [1, 3D]."""
    D = x.shape[-1]
    x_row = x.reshape(1, D).astype(jnp.float32)

    # Resident VMEM estimate: fused weights + scores/exp buffer + small rows.
    vmem_bytes = 4 * (3 * D * D) + 2 * 4 * D * D + 4 * 16 * D
    compiler_params = None
    if vmem_bytes > 16 * 1024 * 1024:  # smallest default scoped limit (v5e)
        compiler_params = pltpu.CompilerParams(
            vmem_limit_bytes=min(2 * vmem_bytes, 100 * 1024 * 1024))

    cost = pl.CostEstimate(
        flops=2 * D * (3 * D)        # fused projection
        + 2 * D * D                  # outer product + exp argument
        + 2 * D * D                  # weighted sum (MXU)
        + 2 * D,                     # normalize
        transcendentals=D * D + D,   # exp + reciprocal
        bytes_accessed=4 * (3 * D * D + 6 * D),
    )

    vmem = pltpu.MemorySpace.VMEM
    return pl.pallas_call(
        self_attention_single_kernel,
        out_shape=jax.ShapeDtypeStruct((1, D), jnp.float32),
        # Single step: no grid -> no dummy pipelining / double-buffered weights.
        in_specs=[
            pl.BlockSpec(memory_space=vmem),   # x row        [1, D]
            pl.BlockSpec(memory_space=vmem),   # fused W_all  [3D, D]
            pl.BlockSpec(memory_space=vmem),   # fused bias   [1, 3D]
        ],
        out_specs=pl.BlockSpec(memory_space=vmem),
        compiler_params=compiler_params,
        cost_estimate=cost,
    )(x_row, w_all, b_all)


def reference(x, wq, bq, wk, bk, wv, bv):
    q = x @ wq.T + bq
    k = x @ wk.T + bk
    v = x @ wv.T + bv
    atten = jax.nn.softmax(q[:, None] * k[None, :], axis=-1)   # [D, D]
    out = atten @ v[:, None]                                   # [D, 1]
    return out.T                                               # [1, D]


if __name__ == "__main__":
    D = 32   # opt.embed_dim

    key = jax.random.PRNGKey(0)
    kx, kwq, kbq, kwk, kbk, kwv, kbv = jax.random.split(key, 7)

    # PyTorch nn.Linear default init: uniform(-1/sqrt(in), 1/sqrt(in))
    bound = 1.0 / jnp.sqrt(jnp.float32(D))
    x = jax.random.normal(kx, (D,), dtype=jnp.float32)
    wq = jax.random.uniform(kwq, (D, D), jnp.float32, -bound, bound)
    bq = jax.random.uniform(kbq, (D,), jnp.float32, -bound, bound)
    wk = jax.random.uniform(kwk, (D, D), jnp.float32, -bound, bound)
    bk = jax.random.uniform(kbk, (D,), jnp.float32, -bound, bound)
    wv = jax.random.uniform(kwv, (D, D), jnp.float32, -bound, bound)
    bv = jax.random.uniform(kbv, (D,), jnp.float32, -bound, bound)

    # Weight prep (concat + f32 cast) happens ONCE, outside the hot path.
    w_all, b_all = prepare_params(wq, bq, wk, bk, wv, bv)

    fwd = jax.jit(self_attention_single)
    out = jax.block_until_ready(fwd(x, w_all, b_all))

    ref = reference(x, wq, bq, wk, bk, wv, bv)
    assert out.shape == (1, D), f"bad output shape {out.shape}"
    # Kernel math is exact f32 (approx=False reciprocal); tolerance mainly covers
    # the XLA reference's default-precision matmuls on TPU.
    assert jnp.allclose(out, ref, atol=2e-3, rtol=2e-3), "mismatch vs reference"

    print("KERNEL_OK")
</pallas_src>

<mosaic_0001>
module attributes {stable_mosaic.version = 11 : i64} {
  func.func @self_attention_single_kernel(%arg0: memref<1x32xf32, #tpu.memory_space<vmem>>, %arg1: memref<96x32xf32, #tpu.memory_space<vmem>>, %arg2: memref<1x96xf32, #tpu.memory_space<vmem>>, %arg3: memref<1x32xf32, #tpu.memory_space<vmem>>) attributes {dimension_semantics = [], scalar_prefetch = 0 : i64, scratch_operands = 0 : i64, tpu.core_type = #tpu.core_type<tc>} {
    %c0 = arith.constant 0 : index
    %c0_0 = arith.constant 0 : index
    %0 = vector.load %arg0[%c0, %c0_0] : memref<1x32xf32, #tpu.memory_space<vmem>>, vector<1x32xf32>
    %c0_1 = arith.constant 0 : index
    %c0_2 = arith.constant 0 : index
    %1 = vector.load %arg1[%c0_1, %c0_2] : memref<96x32xf32, #tpu.memory_space<vmem>>, vector<96x32xf32>
    %cst = arith.constant dense<0.000000e+00> : vector<1x96xf32>
    %2 = tpu.matmul %0, %1, %cst {dimension_numbers = #tpu.dot_dimension_numbers<[1], [1], [0], [0], [0, 0, 1, 0], [], []>} : vector<1x32xf32>, vector<96x32xf32>, vector<1x96xf32> -> vector<1x96xf32>
    %c0_3 = arith.constant 0 : index
    %c0_4 = arith.constant 0 : index
    %3 = vector.load %arg2[%c0_3, %c0_4] : memref<1x96xf32, #tpu.memory_space<vmem>>, vector<1x96xf32>
    %4 = arith.addf %2, %3 : vector<1x96xf32>
    %5 = vector.extract_strided_slice %4 {offsets = [0, 0], sizes = [1, 32], strides = [1, 1]} : vector<1x96xf32> to vector<1x32xf32>
    %6 = vector.extract_strided_slice %4 {offsets = [0, 32], sizes = [1, 32], strides = [1, 1]} : vector<1x96xf32> to vector<1x32xf32>
    %7 = vector.extract_strided_slice %4 {offsets = [0, 64], sizes = [1, 32], strides = [1, 1]} : vector<1x96xf32> to vector<1x32xf32>
    %8 = tpu.transpose %6, [1, 0] : vector<1x32xf32> -> vector<32x1xf32>
    %cst_5 = arith.constant dense<0xFF800000> : vector<1xf32>
    %9 = vector.multi_reduction <maximumf>, %6, %cst_5 [1] : vector<1x32xf32> to vector<1xf32>
    %10 = vector.shape_cast %9 : vector<1xf32> to vector<1x1xf32>
    %cst_6 = arith.constant dense<0x7F800000> : vector<1xf32>
    %11 = vector.multi_reduction <minimumf>, %6, %cst_6 [1] : vector<1x32xf32> to vector<1xf32>
    %12 = vector.shape_cast %11 : vector<1xf32> to vector<1x1xf32>
    %cst_7 = arith.constant 0.000000e+00 : f32
    %13 = vector.broadcast %cst_7 : f32 to vector<1x32xf32>
    %14 = arith.cmpf oge, %5, %13 : vector<1x32xf32>
    %15 = vector.broadcast %10 : vector<1x1xf32> to vector<1x32xf32>
    %16 = arith.mulf %5, %15 : vector<1x32xf32>
    %17 = vector.broadcast %12 : vector<1x1xf32> to vector<1x32xf32>
    %18 = arith.mulf %5, %17 : vector<1x32xf32>
    %19 = arith.select %14, %16, %18 : vector<1x32xi1>, vector<1x32xf32>
    %20 = vector.broadcast %8 : vector<32x1xf32> to vector<32x32xf32>
    %21 = vector.broadcast %5 : vector<1x32xf32> to vector<32x32xf32>
    %22 = arith.mulf %20, %21 : vector<32x32xf32>
    %23 = vector.broadcast %19 : vector<1x32xf32> to vector<32x32xf32>
    %24 = arith.subf %22, %23 : vector<32x32xf32>
    %25 = math.exp %24 : vector<32x32xf32>
    %cst_8 = arith.constant dense<0.000000e+00> : vector<32xf32>
    %26 = vector.multi_reduction <add>, %25, %cst_8 [0] : vector<32x32xf32> to vector<32xf32>
    %27 = vector.shape_cast %26 : vector<32xf32> to vector<1x32xf32>
    %cst_9 = arith.constant dense<0.000000e+00> : vector<1x32xf32>
    %28 = tpu.matmul %7, %25, %cst_9 {dimension_numbers = #tpu.dot_dimension_numbers<[1], [0], [0], [1], [0, 0, 1, 1], [], []>} : vector<1x32xf32>, vector<32x32xf32>, vector<1x32xf32> -> vector<1x32xf32>
    %29 = tpu.reciprocal %27 : vector<1x32xf32> -> vector<1x32xf32>
    %30 = arith.mulf %28, %29 : vector<1x32xf32>
    %c0_10 = arith.constant 0 : index
    %c0_11 = arith.constant 0 : index
    %31 = vector.load %arg3[%c0_10, %c0_11] : memref<1x32xf32, #tpu.memory_space<vmem>>, vector<1x32xf32>
    tpu.vector_store %arg3[%c0_10, %c0_11], %30 {strides = array<i32>} : memref<1x32xf32, #tpu.memory_space<vmem>>, vector<1x32xf32>,
    return
  }
}

</mosaic_0001>

<llo_original>
// kernel: self_attention_single.1
$region0: #{self_attention_single.1}
  #allocation0 [shape = 'u32[]', space=smem, size = 0x4, offset = 0x4, fixed_abs, tag = 'smem constant byte address 0x4 - core index']
  #allocation1 [shape = 'u32[144,128]{1,0:T(1,128)}', space=vmem, size = 0x12000, scoped, tag = 'internal scratch']
  %s0 = inlined_call_operand.vmem [shape: f32[1,32], index: 0, kind: input, shape index: {}]
  %s1 = inlined_call_operand.vmem [shape: f32[96,32], index: 1, kind: input, shape index: {}]
  %s2 = inlined_call_operand.vmem [shape: f32[1,96], index: 2, kind: input, shape index: {}]
  %s3 = inlined_call_operand.hbm [shape: f32[1,32], index: 3, kind: output, shape index: {}]
  %s4 = sld [smem:[#allocation0]]
  $region22: #{self_attention_single.1} parent=0
    _
  %s6 = ssub.s32 1, %s4
  %s7 = scalar_select 0, %s6, %s4
  $region1: #{self_attention_single.1} parent=0
    #allocation2 [shape = 'u8[512]{0}', space=vmem, size = 0x400, scoped, tag = 'output window, operand 0, single buffered']
    #allocation3 [shape = 's32[1]{0}', space=sflag, size = 0x4, scoped, tag = 'scoped memory for self_attention_single.1']
    %8 = vsyncpa [#allocation3], 0
    // Predicated region
    $region2: #{self_attention_single.1} parent=1 // pred_check
      _
    $region3: #{self_attention_single.1} parent=1 // pred_check_branch
      %10 = sbr.rel (0) target = $region5
    $region4: #{self_attention_single.1} parent=1 // pred_region
      _
    $region5: #{self_attention_single.1} parent=1 // pred_fallthru
      _
    // Predicated region
    $region6: #{self_attention_single.1} parent=1 // pred_check
      _
    $region7: #{self_attention_single.1} parent=1 // pred_check_branch
      %12 = sbr.rel (0) target = $region9
    $region8: #{self_attention_single.1} parent=1 // pred_region
      _
    $region9: #{self_attention_single.1} parent=1 // pred_fallthru
      _
    // Predicated region
    $region10: #{self_attention_single.1} parent=1 // pred_check
      _
    $region11: #{self_attention_single.1} parent=1 // pred_check_branch
      %14 = sbr.rel (0) target = $region13
    $region12: #{self_attention_single.1} parent=1 // pred_region
      _
    $region13: #{self_attention_single.1} parent=1 // pred_fallthru
      _
    %v15 = vld [vmem:[%s0] sm:$0x1]
    %v16 = vld [vmem:[%s1] sm:$0xff]
    %v17 = vld [vmem:[%s1 + $0x8] sm:$0xff]
    %v18 = vld [vmem:[%s1 + $0x10] sm:$0xff]
    %v19 = vld [vmem:[%s1 + $0x18] sm:$0xff]
    %v20 = vld [vmem:[%s1 + $0x20] sm:$0xff]
    %v21 = vld [vmem:[%s1 + $0x28] sm:$0xff]
    %v22 = vld [vmem:[%s1 + $0x30] sm:$0xff]
    %v23 = vld [vmem:[%s1 + $0x38] sm:$0xff]
    %v24 = vld [vmem:[%s1 + $0x40] sm:$0xff]
    %v25 = vld [vmem:[%s1 + $0x48] sm:$0xff]
    %v26 = vld [vmem:[%s1 + $0x50] sm:$0xff]
    %v27 = vld [vmem:[%s1 + $0x58] sm:$0xff]
    %v28 = vld [vmem:[%s2] sm:$0x1]
    %vm29 = vcmask 261120
    %v31 = vsel %vm29, %v15, 0
    %v34 = vsel %vm29, %v16, 0
    %v37 = vsel %vm29, %v17, 0
    %v40 = vsel %vm29, %v18, 0
    %v43 = vsel %vm29, %v19, 0
    %v46 = vsel %vm29, %v20, 0
    %v49 = vsel %vm29, %v21, 0
    %v52 = vsel %vm29, %v22, 0
    %v55 = vsel %vm29, %v23, 0
    %v58 = vsel %vm29, %v24, 0
    %v61 = vsel %vm29, %v25, 0
    %v64 = vsel %vm29, %v26, 0
    %v67 = vsel %vm29, %v27, 0
    %69 = vmatprep.subr.mxu0 0.0
    %70 = vmatpush1.xpose.msra.mxu0 %v34
    %71 = vmatprep.subr.mxu0 0.0
    %72 = vmatpush1.xpose.msra.mxu0 %v37
    %73 = vmatprep.subr.mxu0 0.0
    %74 = vmatpush1.xpose.msra.mxu0 %v40
    %75 = vmatprep.subr.mxu0 0.0
    %76 = vmatpush1.xpose.msra.mxu0 %v43
    %77 = vmatprep.subr.mxu0 0.0
    %78 = vmatpush1.xpose.msra.mxu0 %v46
    %79 = vmatprep.subr.mxu0 0.0
    %80 = vmatpush1.xpose.msra.mxu0 %v49
    %81 = vmatprep.subr.mxu0 0.0
    %82 = vmatpush1.xpose.msra.mxu0 %v52
    %83 = vmatprep.subr.mxu0 0.0
    %84 = vmatpush1.xpose.msra.mxu0 %v55
    %85 = vmatprep.subr.mxu0 0.0
    %86 = vmatpush1.xpose.msra.mxu0 %v58
    %87 = vmatprep.subr.mxu0 0.0
    %88 = vmatpush1.xpose.msra.mxu0 %v61
    %89 = vmatprep.subr.mxu0 0.0
    %90 = vmatpush1.xpose.msra.mxu0 %v64
    %91 = vmatprep.subr.mxu0 0.0
    %92 = vmatpush1.xpose.msra.mxu0 %v67
    %93 = vmatprep.subr.mxu0 0.0
    %94 = vmatpush1.xpose.msra.mxu0 0.0
    %95 = vmatprep.subr.mxu0 0.0
    %96 = vmatpush1.xpose.msra.mxu0 0.0
    %97 = vmatprep.subr.mxu0 0.0
    %98 = vmatpush1.xpose.msra.mxu0 0.0
    %99 = vmatprep.subr.mxu0 0.0
    %100 = vmatpush1.xpose.msra.mxu0 0.0
    %101 = vmatprep.subr.mxu0 0.0
    %102 = vmatpush1.xpose.msra.mxu0 0.0
    %103 = vmatprep.subr.mxu0 0.0
    %104 = vmatpush1.xpose.msra.mxu0 0.0
    %105 = vmatprep.subr.mxu0 0.0
    %106 = vmatpush1.xpose.msra.mxu0 0.0
    %107 = vmatprep.subr.mxu0 0.0
    %108 = vmatpush1.xpose.msra.mxu0 0.0
    %109 = vmatprep.subr.mxu0 0.0
    %110 = vmatpush1.xpose.msra.mxu0 0.0
    %111 = vmatprep.subr.mxu0 0.0
    %112 = vmatpush1.xpose.msra.mxu0 0.0
    %113 = vmatprep.subr.mxu0 0.0
    %114 = vmatpush1.xpose.msra.mxu0 0.0
    %115 = vmatprep.subr.mxu0 0.0
    %116 = vmatpush1.xpose.msra.mxu0 0.0
    %117 = vmatprep.subr.mxu0 0.0
    %118 = vmatpush1.xpose.msra.mxu0 0.0
    %119 = vmatprep.subr.mxu0 0.0
    %120 = vmatpush1.xpose.msra.mxu0 0.0
    %121 = vmatprep.subr.mxu0 0.0
    %122 = vmatpush1.xpose.msra.mxu0 0.0
    %123 = vmatprep.subr.mxu0 0.0
    %124 = vmatpush1.xpose.msra.mxu0 0.0
    %125 = vmatprep.subr.mxu0 0.0
    %126 = vmatpush1.xpose.msra.mxu0 0.0
    %127 = vmatprep.subr.mxu0 0.0
    %128 = vmatpush1.xpose.msra.mxu0 0.0
    %129 = vmatprep.subr.mxu0 0.0
    %130 = vmatpush1.xpose.msra.mxu0 0.0
    %131 = vmatprep.subr.mxu0 0.0
    %132 = vmatpush1.xpose.msra.mxu0 0.0
    %133 = vmatprep.mubr.f32.mxu0 0.0
    %134 = vmatmul.mubr.f32.gmra.mrb[0].mxu0 %v31
    %v135 = vpop.f32.mrb[0].mxu0
    %v136 = vadd.f32 %v28, %v135
    %v137 = vpop.f32.mrb[0].mxu0
    %138 = vdwg.mxu0
    %140 = vrot.lane.b32.xlu0 %v136, 96
    %v141 = vpop.permute.xlu0 %140
    %143 = vxpose.xlu0.b32.start [1/16] %v141, 128
    %144 = vxpose.xlu0.b32.cont [2/16] 0.0, 128
    %145 = vxpose.xlu0.b32.cont [3/16] 0.0, 128
    %146 = vxpose.xlu0.b32.cont [4/16] 0.0, 128
    %147 = vxpose.xlu0.b32.cont [5/16] 0.0, 128
    %148 = vxpose.xlu0.b32.cont [6/16] 0.0, 128
    %149 = vxpose.xlu0.b32.cont [7/16] 0.0, 128
    %150 = vxpose.xlu0.b32.cont [8/16] 0.0, 128
    %151 = vxpose.xlu0.b32.cont [9/16] 0.0, 128
    %152 = vxpose.xlu0.b32.cont [10/16] 0.0, 128
    %153 = vxpose.xlu0.b32.cont [11/16] 0.0, 128
    %154 = vxpose.xlu0.b32.cont [12/16] 0.0, 128
    %155 = vxpose.xlu0.b32.cont [13/16] 0.0, 128
    %156 = vxpose.xlu0.b32.cont [14/16] 0.0, 128
    %157 = vxpose.xlu0.b32.cont [15/16] 0.0, 128
    %158 = vxpose.xlu0.b32.end [16/16] 0.0, 128
    %v159 = vpop.trf.xlu0
    %v160 = vpop.trf.xlu0
    %v161 = vpop.trf.xlu0
    %v162 = vpop.trf.xlu0
    %v163 = vpop.trf.xlu0
    %v164 = vpop.trf.xlu0
    %v165 = vpop.trf.xlu0
    %v166 = vpop.trf.xlu0
    %v167 = vpop.trf.xlu0
    %v168 = vpop.trf.xlu0
    %v169 = vpop.trf.xlu0
    %v170 = vpop.trf.xlu0
    %v171 = vpop.trf.xlu0
    %v172 = vpop.trf.xlu0
    %v173 = vpop.trf.xlu0
    %v174 = vpop.trf.xlu0
    %vm175 = vcmask 516352
    %v176 = vsel %vm175, %v136, -inf
    %177 = vmax.xlane.f32.xlu0 %v176
    %v178 = vpop.xlane.xlu0 %177
    %v179 = vsel %vm175, %v136, inf
    %180 = vmin.xlane.f32.xlu0 %v179
    %v181 = vpop.xlane.xlu0 %180
    %vm182 = vcmp.ge.f32.partialorder %v136, 0.0
    %v183 = vmul.f32 %v136, %v178
    %v184 = vmul.f32 %v136, %v181
    %v185 = vsel %vm182, %v183, %v184
    %187 = vset.pattern.permute.xlu0 0
    %188 = vperm.xlu0 %187, %v159
    %v189 = vpop.permute.xlu0 %188
    %192 = vset.pattern.permute.xlu0 0
    %193 = vperm.xlu0 %192, %v160
    %v194 = vpop.permute.xlu0 %193
    %197 = vset.pattern.permute.xlu0 0
    %198 = vperm.xlu0 %197, %v161
    %v199 = vpop.permute.xlu0 %198
    %202 = vset.pattern.permute.xlu0 0
    %203 = vperm.xlu0 %202, %v162
    %v204 = vpop.permute.xlu0 %203
    %v206 = vlaneseq
    %v207 = vshrl.u32 %v206, 7
    %v208 = vsub.s32 0, %v207
    %v209 = vrot.slane %v136, %v208
    %v210 = vmul.f32 %v189, %v209
    %v211 = vmul.f32 %v194, %v209
    %v212 = vmul.f32 %v199, %v209
    %v213 = vmul.f32 %v204, %v209
    %v214 = vlaneseq
    %v215 = vshrl.u32 %v214, 7
    %v216 = vsub.s32 0, %v215
    %v217 = vrot.slane %v185, %v216
    %v218 = vsub.f32 %v210, %v217
    %v219 = vsub.f32 %v211, %v217
    %v220 = vsub.f32 %v212, %v217
    %v221 = vsub.f32 %v213, %v217
    %v222 = vmul.f32 %v218, 1.442695
    %v223 = vpow.pop %v222
    %v224 = vmul.f32 %v219, 1.442695
    %v225 = vpow.pop %v224
    %v226 = vmul.f32 %v220, 1.442695
    %v227 = vpow.pop %v226
    %v228 = vmul.f32 %v221, 1.442695
    %v229 = vpow.pop %v228
    %v230 = vsel %vm29, %v223, 0.0
    %v231 = vsel %vm29, %v225, 0.0
    %v232 = vadd.f32 %v230, %v231
    %v233 = vsel %vm29, %v227, 0.0
    %v234 = vadd.f32 %v232, %v233
    %v235 = vsel %vm29, %v229, 0.0
    %v236 = vadd.f32 %v234, %v235
    %v237 = vrot.slane %v236, 4
    %v238 = vadd.f32 %v236, %v237
    %v239 = vrot.slane %v238, 2
    %v240 = vadd.f32 %v238, %v239
    %v241 = vrot.slane %v240, 1
    %v242 = vadd.f32 %v240, %v241
    %243 = vrot.lane.b32.xlu0 %v136, 64
    %v244 = vpop.permute.xlu0 %243
    %v245 = vsel %vm29, %v244, 0
    %247 = vmatprep.subr.mxu0 0.0
    %248 = vmatpush1.msra.mxu0 %v223
    %249 = vmatprep.subr.mxu0 0.0
    %250 = vmatpush1.msra.mxu0 %v225
    %251 = vmatprep.subr.mxu0 0.0
    %252 = vmatpush1.msra.mxu0 %v227
    %253 = vmatprep.subr.mxu0 0.0
    %254 = vmatpush1.msra.mxu0 %v229
    %255 = vmatprep.subr.mxu0 0.0
    %256 = vmatpush1.msra.mxu0 0.0
    %257 = vmatprep.subr.mxu0 0.0
    %258 = vmatpush1.msra.mxu0 0.0
    %259 = vmatprep.subr.mxu0 0.0
    %260 = vmatpush1.msra.mxu0 0.0
    %261 = vmatprep.subr.mxu0 0.0
    %262 = vmatpush1.msra.mxu0 0.0
    %263 = vmatprep.subr.mxu0 0.0
    %264 = vmatpush1.msra.mxu0 0.0
    %265 = vmatprep.subr.mxu0 0.0
    %266 = vmatpush1.msra.mxu0 0.0
    %267 = vmatprep.subr.mxu0 0.0
    %268 = vmatpush1.msra.mxu0 0.0
    %269 = vmatprep.subr.mxu0 0.0
    %270 = vmatpush1.msra.mxu0 0.0
    %271 = vmatprep.subr.mxu0 0.0
    %272 = vmatpush1.msra.mxu0 0.0
    %273 = vmatprep.subr.mxu0 0.0
    %274 = vmatpush1.msra.mxu0 0.0
    %275 = vmatprep.subr.mxu0 0.0
    %276 = vmatpush1.msra.mxu0 0.0
    %277 = vmatprep.subr.mxu0 0.0
    %278 = vmatpush1.msra.mxu0 0.0
    %279 = vmatprep.subr.mxu0 0.0
    %280 = vmatpush1.msra.mxu0 0.0
    %281 = vmatprep.subr.mxu0 0.0
    %282 = vmatpush1.msra.mxu0 0.0
    %283 = vmatprep.subr.mxu0 0.0
    %284 = vmatpush1.msra.mxu0 0.0
    %285 = vmatprep.subr.mxu0 0.0
    %286 = vmatpush1.msra.mxu0 0.0
    %287 = vmatprep.subr.mxu0 0.0
    %288 = vmatpush1.msra.mxu0 0.0
    %289 = vmatprep.subr.mxu0 0.0
    %290 = vmatpush1.msra.mxu0 0.0
    %291 = vmatprep.subr.mxu0 0.0
    %292 = vmatpush1.msra.mxu0 0.0
    %293 = vmatprep.subr.mxu0 0.0
    %294 = vmatpush1.msra.mxu0 0.0
    %295 = vmatprep.subr.mxu0 0.0
    %296 = vmatpush1.msra.mxu0 0.0
    %297 = vmatprep.subr.mxu0 0.0
    %298 = vmatpush1.msra.mxu0 0.0
    %299 = vmatprep.subr.mxu0 0.0
    %300 = vmatpush1.msra.mxu0 0.0
    %301 = vmatprep.subr.mxu0 0.0
    %302 = vmatpush1.msra.mxu0 0.0
    %303 = vmatprep.subr.mxu0 0.0
    %304 = vmatpush1.msra.mxu0 0.0
    %305 = vmatprep.subr.mxu0 0.0
    %306 = vmatpush1.msra.mxu0 0.0
    %307 = vmatprep.subr.mxu0 0.0
    %308 = vmatpush1.msra.mxu0 0.0
    %309 = vmatprep.subr.mxu0 0.0
    %310 = vmatpush1.msra.mxu0 0.0
    %311 = vmatprep.mubr.f32.mxu0 0.0
    %312 = vmatmul.mubr.f32.gmra.mrb[0].mxu0 %v245
    %v313 = vpop.f32.mrb[0].mxu0
    %v314 = vadd.f32 0.0, %v313
    %v315 = vpop.f32.mrb[0].mxu0
    %316 = vdwg.mxu0
    %v317 = vrcp.pop %v242
    %v318 = vmul.f32 %v314, %v317
    %vm319 = vcmask 253952
    %320 = vst.msk [vmem:[#allocation2] sm:$0x1] %vm319, %v318
    // Predicated region
    $region14: #{self_attention_single.1} parent=1 // pred_check
      _
    $region15: #{self_attention_single.1} parent=1 // pred_check_branch
      %322 = sbr.rel (0) target = $region17
    $region16: #{self_attention_single.1} parent=1 // pred_region
      %s324 = ssub.s32 16, 16
      %325 = vsyncadd [#allocation3], %s324
      %s327 = sshll.u32 [#allocation2], 4
      %s328 = int_to_ptr.vmem [resolvable:$true] %s327
      %330 = dma.vmem_to_hbm [thread:$0]  %s328, 16, %s3, [#allocation3]
    $region17: #{self_attention_single.1} parent=1 // pred_fallthru
      _
    // Predicated region
    $region18: #{self_attention_single.1} parent=1 // pred_check
      _
    $region19: #{self_attention_single.1} parent=1 // pred_check_branch
      %332 = sbr.rel (0) target = $region21
    $region20: #{self_attention_single.1} parent=1 // pred_region
      %333 = dma.done [#allocation3], 16
    $region21: #{self_attention_single.1} parent=1 // pred_fallthru
      _
    %334 = vsyncpa [#allocation3], 1

</llo_original>
